<compile_context>
chip_gen: v5e
topology: v5e:2x2
jax: 0.10.0
libtpu: 0.0.40
codegen_flags: <defaults>
</compile_context>

<pallas_src>
import math

import jax
import jax.numpy as jnp
from jax import lax
from jax.experimental import pallas as pl
from jax.experimental.pallas import tpu as pltpu

# MXU-input / attention-stage activation storage dtype.  Accumulation and all
# softmax math stay in f32 regardless.
_MXU_DTYPE = jnp.bfloat16
_ACT_DTYPE = jnp.bfloat16

# Explicit scoped-VMEM budget (fits v7x's 64 MiB physical; well under v5e/v6e 128 MiB).
_VMEM_LIMIT = 64 * 1024 * 1024


def _pick_tile(dim, target, align=16):
    """Largest `align`-multiple divisor of `dim` that is <= target (else dim itself)."""
    if dim <= target:
        return dim
    t = (target // align) * align
    while t >= align:
        if dim % t == 0:
            return t
        t -= align
    return dim  # TODO(synk): pad + mask the last tile instead of a full-dim fallback.


# --------------------- Q/K/V projection (head-major output) ---------------------

def _head_proj_kernel(x_ref, w_ref, b_ref, o_ref):
    # x: [tl, d_model] (f32), w: [H, d_model, E] (bf16, resident), b: [H, 1, E] (f32)
    # o: [H, tl, E] (bf16) -- all heads for this row tile.
    x = x_ref[...].astype(_MXU_DTYPE)
    H = w_ref.shape[0]
    for h in range(H):                                   # trace-time unrolled
        y = jnp.dot(x, w_ref[h], preferred_element_type=jnp.float32)   # [tl, E] f32
        o_ref[h] = (y + b_ref[h]).astype(o_ref.dtype)


def head_projection(x, w, b, row_tile=512):
    """x: [B, N, d_model] (f32), w: [H, d_model, E] (bf16), b: [H, 1, E] (f32)
       -> [B, H, N, E] (bf16)."""
    B, N, d_in = x.shape
    H, _, E = w.shape
    tl = _pick_tile(N, row_tile)
    return pl.pallas_call(
        _head_proj_kernel,
        out_shape=jax.ShapeDtypeStruct((B, H, N, E), _ACT_DTYPE),
        grid_spec=pltpu.PrefetchScalarGridSpec(
            num_scalar_prefetch=0,
            grid=(B, N // tl),
            in_specs=[
                pl.BlockSpec((None, tl, d_in), lambda b, lt: (b, lt, 0)),
                # Resident weight / bias: constant block index -> fetched once.
                pl.BlockSpec((H, d_in, E), lambda b, lt: (0, 0, 0)),
                pl.BlockSpec((H, 1, E), lambda b, lt: (0, 0, 0)),
            ],
            out_specs=pl.BlockSpec((None, H, tl, E), lambda b, lt: (b, 0, lt, 0)),
        ),
        compiler_params=pltpu.CompilerParams(
            dimension_semantics=("parallel", "parallel"),
            vmem_limit_bytes=_VMEM_LIMIT),
    )(x, w, b)


# ------------------------- flash attention (online softmax) ---------------------

def _flash_kernel(q_ref, k_ref, v_ref, o_ref, m_ref, l_ref, acc_ref):
    ki = pl.program_id(3)

    @pl.when(ki == 0)
    def _():
        m_ref[...] = jnp.full_like(m_ref, -jnp.inf)
        l_ref[...] = jnp.zeros_like(l_ref)
        acc_ref[...] = jnp.zeros_like(acc_ref)

    q = q_ref[...]                           # [tq, E] bf16 (scale folded into Q proj)
    k = k_ref[...]                           # [tk, E] bf16
    # s = q @ k^T, contracting last dims -> no materialized transpose of K.
    s = lax.dot_general(q, k, (((1,), (1,)), ((), ())),
                        preferred_element_type=jnp.float32)       # [tq, tk] f32

    m_prev = m_ref[...]
    m_new = jnp.maximum(m_prev, jnp.max(s, axis=-1, keepdims=True))
    alpha = jnp.exp(m_prev - m_new)                               # f32
    p = jnp.exp(s - m_new)                                        # f32
    l_ref[...] = alpha * l_ref[...] + jnp.sum(p, axis=-1, keepdims=True)
    acc_ref[...] = alpha * acc_ref[...] + jnp.dot(
        p.astype(v_ref.dtype), v_ref[...], preferred_element_type=jnp.float32)
    m_ref[...] = m_new

    @pl.when(ki == pl.num_programs(3) - 1)
    def _():
        # Exact normalization: runs once per (b, h, q-tile), off the inner loop.
        o_ref[...] = (acc_ref[...] / l_ref[...]).astype(o_ref.dtype)


def flash_attention(qh, kh, vh, q_tile=512, kv_tile=1024):
    """qh: [B, H, L, E] bf16 (pre-scaled), kh: [B, H, S, E] bf16, vh: [B, H, S, D] bf16
       -> [B, H, L, D] bf16."""
    B, H, L, E = qh.shape
    S = kh.shape[2]
    D = vh.shape[3]
    tq = _pick_tile(L, q_tile)
    tk = _pick_tile(S, kv_tile)
    return pl.pallas_call(
        _flash_kernel,
        out_shape=jax.ShapeDtypeStruct((B, H, L, D), _ACT_DTYPE),
        grid_spec=pltpu.PrefetchScalarGridSpec(
            num_scalar_prefetch=0,
            grid=(B, H, L // tq, S // tk),
            in_specs=[
                pl.BlockSpec((None, None, tq, E), lambda b, h, qi, ki: (b, h, qi, 0)),
                pl.BlockSpec((None, None, tk, E), lambda b, h, qi, ki: (b, h, ki, 0)),
                pl.BlockSpec((None, None, tk, D), lambda b, h, qi, ki: (b, h, ki, 0)),
            ],
            out_specs=pl.BlockSpec((None, None, tq, D), lambda b, h, qi, ki: (b, h, qi, 0)),
            scratch_shapes=[
                pltpu.VMEM((tq, 1), jnp.float32),   # running max m
                pltpu.VMEM((tq, 1), jnp.float32),   # running sum l
                pltpu.VMEM((tq, D), jnp.float32),   # unnormalized accumulator
            ]),
        compiler_params=pltpu.CompilerParams(
            dimension_semantics=("parallel", "parallel", "parallel", "arbitrary"),
            vmem_limit_bytes=_VMEM_LIMIT),
    )(qh, kh, vh)


# --------------------- output projection (consumes head-major) ------------------

def _out_proj_kernel(a_ref, w_ref, b_ref, o_ref):
    # a: [H, tl, D] (bf16), w: [H, D, d_model] (bf16, resident), b: [1, d_model] (f32)
    # o: [tl, d_model] (f32).  Heads folded into one grid step (unrolled loop).
    H = a_ref.shape[0]
    acc = jnp.dot(a_ref[0], w_ref[0], preferred_element_type=jnp.float32)
    for h in range(1, H):                                # trace-time unrolled
        acc += jnp.dot(a_ref[h], w_ref[h], preferred_element_type=jnp.float32)
    o_ref[...] = (acc + b_ref[...]).astype(o_ref.dtype)


def out_projection(attn, w, b, out_dtype, row_tile=512):
    """attn: [B, H, L, D] bf16, w: [H, D, d_model] bf16, b: [1, d_model] f32
       -> [B, L, d_model] out_dtype."""
    B, H, L, D = attn.shape
    d_out = w.shape[2]
    tl = _pick_tile(L, row_tile)
    return pl.pallas_call(
        _out_proj_kernel,
        out_shape=jax.ShapeDtypeStruct((B, L, d_out), out_dtype),
        grid_spec=pltpu.PrefetchScalarGridSpec(
            num_scalar_prefetch=0,
            grid=(B, L // tl),
            in_specs=[
                pl.BlockSpec((None, H, tl, D), lambda b, lt: (b, 0, lt, 0)),
                # Resident weight / bias: constant block index -> fetched once.
                pl.BlockSpec((H, D, d_out), lambda b, lt: (0, 0, 0)),
                pl.BlockSpec((1, d_out), lambda b, lt: (0, 0)),
            ],
            out_specs=pl.BlockSpec((None, tl, d_out), lambda b, lt: (b, lt, 0)),
        ),
        compiler_params=pltpu.CompilerParams(
            dimension_semantics=("parallel", "parallel"),
            vmem_limit_bytes=_VMEM_LIMIT),
    )(attn, w, b)


# ----------------------------- module wrapper -----------------------------------

def init_attention_params(key, d_model, n_heads, d_keys=None, d_values=None,
                          dtype=jnp.float32):
    d_keys = d_keys or d_model // n_heads
    d_values = d_values or d_model // n_heads
    ks = jax.random.split(key, 8)

    def lin(kw, kb, fan_in, fan_out):
        bound = 1.0 / math.sqrt(fan_in)
        w = jax.random.uniform(kw, (fan_in, fan_out), dtype, -bound, bound)
        b = jax.random.uniform(kb, (fan_out,), dtype, -bound, bound)
        return w, b

    wq, bq = lin(ks[0], ks[1], d_model, d_keys * n_heads)
    wk, bk = lin(ks[2], ks[3], d_model, d_keys * n_heads)
    wv, bv = lin(ks[4], ks[5], d_model, d_values * n_heads)
    wo, bo = lin(ks[6], ks[7], d_values * n_heads, d_model)
    return dict(wq=wq, bq=bq, wk=wk, bk=bk, wv=wv, bv=bv, wo=wo, bo=bo)


def attention_forward(queries, keys, values, params, n_heads, scale=None,
                      output_attention=False):
    """Matches PyTorch Attention.forward (eval mode: dropout = identity)."""
    B, L, d_model = queries.shape
    _, S, _ = keys.shape
    H = n_heads
    E = params["wq"].shape[1] // H
    D = params["wv"].shape[1] // H
    scale = scale if scale is not None else 1.0 / math.sqrt(E)

    # Head-major weight views (cheap: tiny weight tensors, one reshape/transpose each;
    # all activation-sized tensors stay untransposed).  Scale folded into Q; weights
    # cast to bf16 so the resident copies are half-size and feed the MXU natively.
    wq = (params["wq"] * scale).reshape(d_model, H, E).transpose(1, 0, 2).astype(_MXU_DTYPE)
    bq = (params["bq"] * scale).reshape(H, 1, E)                       # bias stays f32
    wk = params["wk"].reshape(d_model, H, E).transpose(1, 0, 2).astype(_MXU_DTYPE)
    bk = params["bk"].reshape(H, 1, E)
    wv = params["wv"].reshape(d_model, H, D).transpose(1, 0, 2).astype(_MXU_DTYPE)
    bv = params["bv"].reshape(H, 1, D)
    wo = params["wo"].reshape(H, D, d_model).astype(_MXU_DTYPE)
    bo = params["bo"].reshape(1, d_model)

    qh = head_projection(queries, wq, bq)        # [B, H, L, E] bf16, pre-scaled
    kh = head_projection(keys, wk, bk)           # [B, H, S, E] bf16
    vh = head_projection(values, wv, bv)         # [B, H, S, D] bf16

    oh = flash_attention(qh, kh, vh)             # [B, H, L, D] bf16
    out = out_projection(oh, wo, bo, queries.dtype)   # [B, L, d_model] f32

    if output_attention:
        # TODO(synk): the flash kernel does not materialize the attention matrix A.
        return out, None
    return out, None


# ----------------------------- reference (pure JAX) ------------------------------

def attention_reference(queries, keys, values, params, n_heads, scale=None):
    B, L, d_model = queries.shape
    _, S, _ = keys.shape
    H = n_heads
    q = (queries @ params["wq"] + params["bq"]).reshape(B, L, H, -1)
    k = (keys @ params["wk"] + params["bk"]).reshape(B, S, H, -1)
    v = (values @ params["wv"] + params["bv"]).reshape(B, S, H, -1)
    E = q.shape[-1]
    scale = scale if scale is not None else 1.0 / math.sqrt(E)
    scores = jnp.einsum("blhe,bshe->bhls", q, k)
    A = jax.nn.softmax(scale * scores, axis=-1)
    V = jnp.einsum("bhls,bshd->blhd", A, v)
    out = V.reshape(B, L, -1) @ params["wo"] + params["bo"]
    return out


# ----------------------------- main ----------------------------------------------

if __name__ == "__main__":
    d_model, n_heads = 32, 4
    B, L, S = 2, 8, 8

    key = jax.random.PRNGKey(0)
    kq, kk, kv, kp = jax.random.split(key, 4)
    queries = jax.random.normal(kq, (B, L, d_model), jnp.float32)
    keys = jax.random.normal(kk, (B, S, d_model), jnp.float32)
    values = jax.random.normal(kv, (B, S, d_model), jnp.float32)

    params = init_attention_params(kp, d_model, n_heads)

    out, attn = attention_forward(queries, keys, values, params, n_heads)
    out = jax.block_until_ready(out)

    ref = attention_reference(queries, keys, values, params, n_heads)
    assert out.shape == (B, L, d_model)
    # Tolerance accounts for bf16 storage of the attention-stage activations and
    # bf16 MXU inputs (accumulation and softmax math stay f32).
    assert jnp.allclose(out, ref, atol=5e-2, rtol=5e-2), "mismatch vs JAX reference"

    print("KERNEL_OK")
</pallas_src>

<mosaic_0001>
module attributes {stable_mosaic.version = 11 : i64} {
  func.func @_head_proj_kernel(%arg0: i32, %arg1: i32, %arg2: memref<1x8x32xf32, #tpu.memory_space<vmem>>, %arg3: memref<4x32x8xbf16, #tpu.memory_space<vmem>>, %arg4: memref<4x1x8xf32, #tpu.memory_space<vmem>>, %arg5: memref<1x4x8x8xbf16, #tpu.memory_space<vmem>>) attributes {dimension_semantics = [#tpu.dimension_semantics<parallel>, #tpu.dimension_semantics<parallel>], iteration_bounds = array<i64: 2, 1>, scalar_prefetch = 0 : i64, scratch_operands = 0 : i64, tpu.core_type = #tpu.core_type<tc>, window_params = [{transform_indices = @transform_0, window_bounds = array<i64: 1, 8, 32>}, {pipeline_mode = #tpu.pipeline_mode<synchronous>, transform_indices = @transform_1, window_bounds = array<i64: 4, 32, 8>}, {pipeline_mode = #tpu.pipeline_mode<synchronous>, transform_indices = @transform_2, window_bounds = array<i64: 4, 1, 8>}, {transform_indices = @transform_3, window_bounds = array<i64: 1, 4, 8, 8>}]} {
    %c0 = arith.constant 0 : index
    %c0_0 = arith.constant 0 : index
    %c0_1 = arith.constant 0 : index
    %0 = vector.load %arg2[%c0, %c0_0, %c0_1] : memref<1x8x32xf32, #tpu.memory_space<vmem>>, vector<1x8x32xf32>
    %1 = vector.shape_cast %0 : vector<1x8x32xf32> to vector<8x32xf32>
    %2 = arith.truncf %1 : vector<8x32xf32> to vector<8x32xbf16>
    %c0_2 = arith.constant 0 : index
    %c0_3 = arith.constant 0 : index
    %c0_4 = arith.constant 0 : index
    %3 = vector.load %arg3[%c0_2, %c0_3, %c0_4] : memref<4x32x8xbf16, #tpu.memory_space<vmem>>, vector<1x32x8xbf16>
    %4 = vector.shape_cast %3 : vector<1x32x8xbf16> to vector<32x8xbf16>
    %cst = arith.constant dense<0.000000e+00> : vector<8x8xf32>
    %5 = tpu.matmul %2, %4, %cst {dimension_numbers = #tpu.dot_dimension_numbers<[1], [0], [0], [1], [0, 0, 1, 1], [], []>} : vector<8x32xbf16>, vector<32x8xbf16>, vector<8x8xf32> -> vector<8x8xf32>
    %c0_5 = arith.constant 0 : index
    %c0_6 = arith.constant 0 : index
    %c0_7 = arith.constant 0 : index
    %6 = vector.load %arg4[%c0_5, %c0_6, %c0_7] : memref<4x1x8xf32, #tpu.memory_space<vmem>>, vector<1x1x8xf32>
    %7 = vector.shape_cast %6 : vector<1x1x8xf32> to vector<1x8xf32>
    %8 = vector.broadcast %7 : vector<1x8xf32> to vector<8x8xf32>
    %9 = arith.addf %5, %8 : vector<8x8xf32>
    %10 = arith.truncf %9 : vector<8x8xf32> to vector<8x8xbf16>
    %c0_8 = arith.constant 0 : index
    %c0_9 = arith.constant 0 : index
    %c0_10 = arith.constant 0 : index
    %c0_11 = arith.constant 0 : index
    %11 = vector.load %arg5[%c0_8, %c0_9, %c0_10, %c0_11] : memref<1x4x8x8xbf16, #tpu.memory_space<vmem>>, vector<1x1x8x8xbf16>
    %12 = vector.shape_cast %11 : vector<1x1x8x8xbf16> to vector<8x8xbf16>
    %13 = vector.shape_cast %10 : vector<8x8xbf16> to vector<1x1x8x8xbf16>
    tpu.vector_store %arg5[%c0_8, %c0_9, %c0_10, %c0_11], %13 {strides = array<i32>} : memref<1x4x8x8xbf16, #tpu.memory_space<vmem>>, vector<1x1x8x8xbf16>,
    %c1 = arith.constant 1 : index
    %c0_12 = arith.constant 0 : index
    %c0_13 = arith.constant 0 : index
    %14 = vector.load %arg3[%c1, %c0_12, %c0_13] : memref<4x32x8xbf16, #tpu.memory_space<vmem>>, vector<1x32x8xbf16>
    %15 = vector.shape_cast %14 : vector<1x32x8xbf16> to vector<32x8xbf16>
    %cst_14 = arith.constant dense<0.000000e+00> : vector<8x8xf32>
    %16 = tpu.matmul %2, %15, %cst_14 {dimension_numbers = #tpu.dot_dimension_numbers<[1], [0], [0], [1], [0, 0, 1, 1], [], []>} : vector<8x32xbf16>, vector<32x8xbf16>, vector<8x8xf32> -> vector<8x8xf32>
    %c1_15 = arith.constant 1 : index
    %c0_16 = arith.constant 0 : index
    %c0_17 = arith.constant 0 : index
    %17 = vector.load %arg4[%c1_15, %c0_16, %c0_17] : memref<4x1x8xf32, #tpu.memory_space<vmem>>, vector<1x1x8xf32>
    %18 = vector.shape_cast %17 : vector<1x1x8xf32> to vector<1x8xf32>
    %19 = vector.broadcast %18 : vector<1x8xf32> to vector<8x8xf32>
    %20 = arith.addf %16, %19 : vector<8x8xf32>
    %21 = arith.truncf %20 : vector<8x8xf32> to vector<8x8xbf16>
    %c0_18 = arith.constant 0 : index
    %c1_19 = arith.constant 1 : index
    %c0_20 = arith.constant 0 : index
    %c0_21 = arith.constant 0 : index
    %22 = vector.load %arg5[%c0_18, %c1_19, %c0_20, %c0_21] : memref<1x4x8x8xbf16, #tpu.memory_space<vmem>>, vector<1x1x8x8xbf16>
    %23 = vector.shape_cast %22 : vector<1x1x8x8xbf16> to vector<8x8xbf16>
    %24 = vector.shape_cast %21 : vector<8x8xbf16> to vector<1x1x8x8xbf16>
    tpu.vector_store %arg5[%c0_18, %c1_19, %c0_20, %c0_21], %24 {strides = array<i32>} : memref<1x4x8x8xbf16, #tpu.memory_space<vmem>>, vector<1x1x8x8xbf16>,
    %c2 = arith.constant 2 : index
    %c0_22 = arith.constant 0 : index
    %c0_23 = arith.constant 0 : index
    %25 = vector.load %arg3[%c2, %c0_22, %c0_23] : memref<4x32x8xbf16, #tpu.memory_space<vmem>>, vector<1x32x8xbf16>
    %26 = vector.shape_cast %25 : vector<1x32x8xbf16> to vector<32x8xbf16>
    %cst_24 = arith.constant dense<0.000000e+00> : vector<8x8xf32>
    %27 = tpu.matmul %2, %26, %cst_24 {dimension_numbers = #tpu.dot_dimension_numbers<[1], [0], [0], [1], [0, 0, 1, 1], [], []>} : vector<8x32xbf16>, vector<32x8xbf16>, vector<8x8xf32> -> vector<8x8xf32>
    %c2_25 = arith.constant 2 : index
    %c0_26 = arith.constant 0 : index
    %c0_27 = arith.constant 0 : index
    %28 = vector.load %arg4[%c2_25, %c0_26, %c0_27] : memref<4x1x8xf32, #tpu.memory_space<vmem>>, vector<1x1x8xf32>
    %29 = vector.shape_cast %28 : vector<1x1x8xf32> to vector<1x8xf32>
    %30 = vector.broadcast %29 : vector<1x8xf32> to vector<8x8xf32>
    %31 = arith.addf %27, %30 : vector<8x8xf32>
    %32 = arith.truncf %31 : vector<8x8xf32> to vector<8x8xbf16>
    %c0_28 = arith.constant 0 : index
    %c2_29 = arith.constant 2 : index
    %c0_30 = arith.constant 0 : index
    %c0_31 = arith.constant 0 : index
    %33 = vector.load %arg5[%c0_28, %c2_29, %c0_30, %c0_31] : memref<1x4x8x8xbf16, #tpu.memory_space<vmem>>, vector<1x1x8x8xbf16>
    %34 = vector.shape_cast %33 : vector<1x1x8x8xbf16> to vector<8x8xbf16>
    %35 = vector.shape_cast %32 : vector<8x8xbf16> to vector<1x1x8x8xbf16>
    tpu.vector_store %arg5[%c0_28, %c2_29, %c0_30, %c0_31], %35 {strides = array<i32>} : memref<1x4x8x8xbf16, #tpu.memory_space<vmem>>, vector<1x1x8x8xbf16>,
    %c3 = arith.constant 3 : index
    %c0_32 = arith.constant 0 : index
    %c0_33 = arith.constant 0 : index
    %36 = vector.load %arg3[%c3, %c0_32, %c0_33] : memref<4x32x8xbf16, #tpu.memory_space<vmem>>, vector<1x32x8xbf16>
    %37 = vector.shape_cast %36 : vector<1x32x8xbf16> to vector<32x8xbf16>
    %cst_34 = arith.constant dense<0.000000e+00> : vector<8x8xf32>
    %38 = tpu.matmul %2, %37, %cst_34 {dimension_numbers = #tpu.dot_dimension_numbers<[1], [0], [0], [1], [0, 0, 1, 1], [], []>} : vector<8x32xbf16>, vector<32x8xbf16>, vector<8x8xf32> -> vector<8x8xf32>
    %c3_35 = arith.constant 3 : index
    %c0_36 = arith.constant 0 : index
    %c0_37 = arith.constant 0 : index
    %39 = vector.load %arg4[%c3_35, %c0_36, %c0_37] : memref<4x1x8xf32, #tpu.memory_space<vmem>>, vector<1x1x8xf32>
    %40 = vector.shape_cast %39 : vector<1x1x8xf32> to vector<1x8xf32>
    %41 = vector.broadcast %40 : vector<1x8xf32> to vector<8x8xf32>
    %42 = arith.addf %38, %41 : vector<8x8xf32>
    %43 = arith.truncf %42 : vector<8x8xf32> to vector<8x8xbf16>
    %c0_38 = arith.constant 0 : index
    %c3_39 = arith.constant 3 : index
    %c0_40 = arith.constant 0 : index
    %c0_41 = arith.constant 0 : index
    %44 = vector.load %arg5[%c0_38, %c3_39, %c0_40, %c0_41] : memref<1x4x8x8xbf16, #tpu.memory_space<vmem>>, vector<1x1x8x8xbf16>
    %45 = vector.shape_cast %44 : vector<1x1x8x8xbf16> to vector<8x8xbf16>
    %46 = vector.shape_cast %43 : vector<8x8xbf16> to vector<1x1x8x8xbf16>
    tpu.vector_store %arg5[%c0_38, %c3_39, %c0_40, %c0_41], %46 {strides = array<i32>} : memref<1x4x8x8xbf16, #tpu.memory_space<vmem>>, vector<1x1x8x8xbf16>,
    return
  }
  func.func @transform_0(%arg0: i32, %arg1: i32) -> (i32, i32, i32) {
    %c0_i32 = arith.constant 0 : i32
    %c0_i32_0 = arith.constant 0 : i32
    return %arg0, %arg1, %c0_i32 : i32, i32, i32
  }
  func.func @transform_1(%arg0: i32, %arg1: i32) -> (i32, i32, i32) {
    %c0_i32 = arith.constant 0 : i32
    %c0_i32_0 = arith.constant 0 : i32
    %c0_i32_1 = arith.constant 0 : i32
    %c0_i32_2 = arith.constant 0 : i32
    return %c0_i32, %c0_i32_0, %c0_i32_1 : i32, i32, i32
  }
  func.func @transform_2(%arg0: i32, %arg1: i32) -> (i32, i32, i32) {
    %c0_i32 = arith.constant 0 : i32
    %c0_i32_0 = arith.constant 0 : i32
    %c0_i32_1 = arith.constant 0 : i32
    %c0_i32_2 = arith.constant 0 : i32
    return %c0_i32, %c0_i32_0, %c0_i32_1 : i32, i32, i32
  }
  func.func @transform_3(%arg0: i32, %arg1: i32) -> (i32, i32, i32, i32) {
    %c0_i32 = arith.constant 0 : i32
    %c0_i32_0 = arith.constant 0 : i32
    %c0_i32_1 = arith.constant 0 : i32
    return %arg0, %c0_i32, %arg1, %c0_i32_0 : i32, i32, i32, i32
  }
}

</mosaic_0001>

<llo_original>
// kernel: tpu_custom_call.1
$region0: #{tpu_custom_call.1}
  #allocation0 [shape = 'u32[]', space=smem, size = 0x4, offset = 0x4, fixed_abs, tag = 'smem constant byte address 0x4 - core index']
  #allocation1 [shape = 'u32[72,128]{1,0:T(1,128)}', space=vmem, size = 0x9000, scoped, tag = 'internal scratch']
  %s0 = inlined_call_operand.vmem [shape: f32[2,8,32], index: 0, kind: input, shape index: {}]
  %s1 = inlined_call_operand.vmem [shape: bf16[4,32,8], index: 1, kind: input, shape index: {}]
  %s2 = inlined_call_operand.vmem [shape: f32[4,1,8], index: 2, kind: input, shape index: {}]
  %s3 = inlined_call_operand.hbm [shape: bf16[2,4,8,8], index: 3, kind: output, shape index: {}]
  %s4 = sld [smem:[#allocation0]]
  $region45: #{tpu_custom_call.1} parent=0
    _
  %s6 = ssub.s32 1, %s4
  %s7 = scalar_select 0, %s6, %s4
  $region1: #{tpu_custom_call.1} parent=0
    #allocation2 [shape = 'u8[16384]{0}', space=vmem, size = 0x4000, scoped, tag = 'output window, operand 0']
    #allocation3 [shape = 's32[2]{0}', space=sflag, size = 0x8, scoped, tag = 'scoped memory for tpu_custom_call.1']
    %8 = vsyncpa [#allocation3], 0
    %s9 = scalar_lea.sflag [#allocation3], 1
    %10 = vsyncpa %s9, 0
    loop: start=0, step=1, limit=4
    $region2: #{tpu_custom_call.1} parent=1 // loop_pre_header
      _
    $region3: #{tpu_custom_call.1} parent=1 // loop_header
      %s12 = sphi 0, %s16
      %p13 = scmp.ge.s32.totalorder %s12, 4
      %s19 = sphi 0, %s31
      %s20 = sphi 0, %s27
      %s21 = sphi 0, %s19
      %s22 = sphi 0, %s20
      %s23 = sphi 0, %s21
      %s24 = sphi 0, %s22
      %s36 = sphi 0, %s38
      %s39 = sphi 0, %s36
      %s40 = sphi 0, %s39
      %s56 = sphi 0, %s40
      %s60 = sphi 0, %s60
      %s62 = sphi 0, %s60
      %s63 = sphi 0, %s62
      %s77 = sphi 0, %s63
      %s81 = sphi 0, %s81
      %s83 = sphi 0, %s81
      %s84 = sphi 0, %s83
      %s98 = sphi 0, %s84
      %s106 = sphi 0, %s108
      %s109 = sphi 0, %s106
      %s110 = sphi 0, %s109
      %s126 = sphi 0, %s110
    $region4: #{tpu_custom_call.1} parent=1 // loop_header_branch
      %15 = sbr.rel (%p13) target = $region8
    $region5: #{tpu_custom_call.1} parent=1 // loop_body
      %s17 = ssub.s32 %s12, 1
      %s18 = ssub.s32 %s12, 2
      %s25 = sadd.s32 1, %s20
      %p26 = scmp.ge.s32.totalorder %s25, 1
      %s27 = scalar_select %p26, 0, %s25
      %s28 = sadd.s32 1, %s19
      %s29 = scalar_select %p26, %s28, %s19
      %p30 = scmp.ge.s32.totalorder %s29, 2
      %s31 = scalar_select %p30, 0, %s29
      %s32 = ssub.s32 %s19, %s31
      %s33 = ssub.s32 %s20, %s27
      %s34 = sor.u32 %s32, %s33
      %p35 = scmp.eq.s32.totalorder %s34, 0
      %s37 = sadd.s32 %s36, 1
      %s38 = scalar_select %p35, %s36, %s37
      %p41 = pneg %p35
      %p42 = scmp.eq.s32.totalorder %s12, 1
      %p43 = por %p41, %p42
      %p44 = scmp.ne.s32.totalorder %s36, %s39
      %p45 = scmp.eq.s32.totalorder %s12, 0
      %p46 = por %p44, %p45
      %p47 = scmp.ne.s32.totalorder %s36, %s39
      %p48 = scmp.eq.s32.totalorder %s17, 1
      %p49 = por %p47, %p48
      %p50 = scmp.ne.s32.totalorder %s39, %s40
      %p51 = scmp.eq.s32.totalorder %s17, 0
      %p52 = por %p50, %p51
      %p53 = scmp.ne.s32.totalorder %s39, %s40
      %p54 = scmp.eq.s32.totalorder %s18, 1
      %p55 = por %p53, %p54
      %p57 = scmp.ne.s32.totalorder %s40, %s56
      %p58 = scmp.eq.s32.totalorder %s18, 0
      %p59 = por %p57, %p58
      %s61 = sadd.s32 %s60, 1
      %p64 = scmp.eq.s32.totalorder %s12, 1
      %p65 = scmp.ne.s32.totalorder %s60, %s62
      %p66 = scmp.eq.s32.totalorder %s12, 0
      %p67 = por %p65, %p66
      %p68 = scmp.ne.s32.totalorder %s60, %s62
      %p69 = scmp.eq.s32.totalorder %s17, 1
      %p70 = por %p68, %p69
      %p71 = scmp.ne.s32.totalorder %s62, %s63
      %p72 = scmp.eq.s32.totalorder %s17, 0
      %p73 = por %p71, %p72
      %p74 = scmp.ne.s32.totalorder %s62, %s63
      %p75 = scmp.eq.s32.totalorder %s18, 1
      %p76 = por %p74, %p75
      %p78 = scmp.ne.s32.totalorder %s63, %s77
      %p79 = scmp.eq.s32.totalorder %s18, 0
      %p80 = por %p78, %p79
      %s82 = sadd.s32 %s81, 1
      %p85 = scmp.eq.s32.totalorder %s12, 1
      %p86 = scmp.ne.s32.totalorder %s81, %s83
      %p87 = scmp.eq.s32.totalorder %s12, 0
      %p88 = por %p86, %p87
      %p89 = scmp.ne.s32.totalorder %s81, %s83
      %p90 = scmp.eq.s32.totalorder %s17, 1
      %p91 = por %p89, %p90
      %p92 = scmp.ne.s32.totalorder %s83, %s84
      %p93 = scmp.eq.s32.totalorder %s17, 0
      %p94 = por %p92, %p93
      %p95 = scmp.ne.s32.totalorder %s83, %s84
      %p96 = scmp.eq.s32.totalorder %s18, 1
      %p97 = por %p95, %p96
      %p99 = scmp.ne.s32.totalorder %s84, %s98
      %p100 = scmp.eq.s32.totalorder %s18, 0
      %p101 = por %p99, %p100
      %s102 = ssub.s32 %s19, %s31
      %s103 = ssub.s32 %s20, %s27
      %s104 = sor.u32 %s102, %s103
      %p105 = scmp.eq.s32.totalorder %s104, 0
      %s107 = sadd.s32 %s106, 1
      %s108 = scalar_select %p105, %s106, %s107
      %p111 = pneg %p105
      %p112 = scmp.eq.s32.totalorder %s12, 1
      %p113 = por %p111, %p112
      %p114 = scmp.ne.s32.totalorder %s106, %s109
      %p115 = scmp.eq.s32.totalorder %s12, 0
      %p116 = por %p114, %p115
      %p117 = scmp.ne.s32.totalorder %s106, %s109
      %p118 = scmp.eq.s32.totalorder %s17, 1
      %p119 = por %p117, %p118
      %p120 = scmp.ne.s32.totalorder %s109, %s110
      %p121 = scmp.eq.s32.totalorder %s17, 0
      %p122 = por %p120, %p121
      %p123 = scmp.ne.s32.totalorder %s109, %s110
      %p124 = scmp.eq.s32.totalorder %s18, 1
      %p125 = por %p123, %p124
      %p127 = scmp.ne.s32.totalorder %s110, %s126
      %p128 = scmp.eq.s32.totalorder %s18, 0
      %p129 = por %p127, %p128
      %p130 = scmp.le.s32.totalorder 1, %s12
      %p131 = scmp.lt.s32.totalorder %s12, 3
      %p132 = pnand %p130, %p131
      %p133 = pneg %p132
      // Predicated region
      $region9: #{tpu_custom_call.1} parent=5 // pred_check
        _
      $region10: #{tpu_custom_call.1} parent=5 // pred_check_branch
        %135 = sbr.rel (%p132) target = $region12
      $region11: #{tpu_custom_call.1} parent=5 // pred_region
        %s136 = ssub.s32 %s12, 1
        // Predicated region
        $region13: #{tpu_custom_call.1} parent=11 // pred_check
          %p137 = pneg %p73
        $region14: #{tpu_custom_call.1} parent=11 // pred_check_branch
          %139 = sbr.rel (%p137) target = $region16
        $region15: #{tpu_custom_call.1} parent=11 // pred_region
          _
        $region16: #{tpu_custom_call.1} parent=11 // pred_fallthru
          _
        // Predicated region
        $region17: #{tpu_custom_call.1} parent=11 // pred_check
          %p140 = pneg %p94
        $region18: #{tpu_custom_call.1} parent=11 // pred_check_branch
          %142 = sbr.rel (%p140) target = $region20
        $region19: #{tpu_custom_call.1} parent=11 // pred_region
          _
        $region20: #{tpu_custom_call.1} parent=11 // pred_fallthru
          _
      $region12: #{tpu_custom_call.1} parent=5 // pred_fallthru
        _
      %p143 = scmp.lt.s32.totalorder %s12, 2
      // Predicated region
      $region21: #{tpu_custom_call.1} parent=5 // pred_check
        %p144 = pneg %p143
      $region22: #{tpu_custom_call.1} parent=5 // pred_check_branch
        %146 = sbr.rel (%p144) target = $region24
      $region23: #{tpu_custom_call.1} parent=5 // pred_region
        // Predicated region
        $region25: #{tpu_custom_call.1} parent=23 // pred_check
          %p147 = pneg %p46
        $region26: #{tpu_custom_call.1} parent=23 // pred_check_branch
          %149 = sbr.rel (%p147) target = $region28
        $region27: #{tpu_custom_call.1} parent=23 // pred_region
          %p150 = scmp.lt.s32.totalorder %s19, 1
          %s151 = scalar_select %p150, %s19, 1
          %p152 = scmp.lt.s32.totalorder %s20, 0
          %s153 = scalar_select %p152, %s20, 0
          %s154 = sadd.s32 %s153, %s151
          %s155 = smul.addr %s154, 8
          %s156 = scalar_lea.vmem %s0, %s155
        $region28: #{tpu_custom_call.1} parent=23 // pred_fallthru
          _
      $region24: #{tpu_custom_call.1} parent=5 // pred_fallthru
        _
      %p157 = scmp.le.s32.totalorder 1, %s12
      %p158 = scmp.lt.s32.totalorder %s12, 3
      %p159 = pnand %p157, %p158
      %p160 = pneg %p159
      // Predicated region
      $region29: #{tpu_custom_call.1} parent=5 // pred_check
        _
      $region30: #{tpu_custom_call.1} parent=5 // pred_check_branch
        %162 = sbr.rel (%p159) target = $region32
      $region31: #{tpu_custom_call.1} parent=5 // pred_region
        %s163 = ssub.s32 %s12, 1
        %p164 = scmp.lt.s32.totalorder %s21, 1
        %s165 = scalar_select %p164, %s21, 1
        %p166 = scmp.lt.s32.totalorder %s22, 0
        %s167 = scalar_select %p166, %s22, 0
        %s168 = sadd.s32 %s167, %s165
        %s169 = smul.addr %s168, 8
        %s170 = scalar_lea.vmem %s0, %s169
        %p171 = pneg %p52
        %p172 = pneg %p49
        %p173 = pneg %p73
        %p174 = pneg %p70
        %p175 = pneg %p94
        %p176 = pneg %p91
        %p177 = pneg %p122
        %p178 = pneg %p119
        %s179 = sand.u32 %s109, 1
        %s180 = scalar_lea.sflag [#allocation3], %s179
        %s181 = sand.u32 %s109, 1
        %s182 = smul.addr %s181, 16
        %s183 = scalar_lea.vmem [#allocation2], %s182
        %p184 = scmp.lt.s32.totalorder %s21, 1
        %s185 = scalar_select %p184, %s21, 1
        %p186 = scmp.lt.s32.totalorder %s22, 0
        %s187 = scalar_select %p186, %s22, 0
        %s188 = sadd.s32 %s187, %s185
        %s189 = smul.addr %s188, 8
        %s190 = scalar_lea.vmem %s0, %s189
        %v192 = vld [vmem:[%s190] sm:$0xff]
        %v193 = vpack.c.bf16 %v192, %v192
        %v194 = vld [vmem:[%s1] sm:$0xf]
        %v195 = vld [vmem:[%s1 + $0x4] sm:$0xf]
        %v196 = vld [vmem:[%s1 + $0x8] sm:$0xf]
        %v197 = vld [vmem:[%s1 + $0xc] sm:$0xf]
        %v198 = vld [vmem:[%s2] sm:$0x1]
        %v200 = vperm.slane %v198, 0
        %v206 = vunpack.c.l.b16 %v194
        %v207 = vunpack.c.l.b16 %v195
        %v208 = vunpack.c.l.b16 %v196
        %v209 = vunpack.c.l.b16 %v197
        %v210 = vpack.c.b16 %v207, %v206
        %v211 = vpack.c.b16 %v209, %v208
        %vm214 = vcmask 261120
        %v216 = vsel %vm214, %v193, 0
        %218 = vmatpush.bf16.msra.mxu0 0
        %219 = vmatpush.bf16.msra.mxu0 0
        %220 = vmatpush.bf16.msra.mxu0 0
        %221 = vmatpush.bf16.msra.mxu0 0
        %222 = vmatpush.bf16.msra.mxu0 0
        %223 = vmatpush.bf16.msra.mxu0 0
        %224 = vmatpush.bf16.msra.mxu0 %v211
        %225 = vmatpush.bf16.msra.mxu0 %v210
        %226 = vmatmul.bf16.gmra.mxu0 %v216
        %v227 = vpop.f32.mrf.mxu0
        %v228 = vadd.f32 %v200, %v227
        %v229 = vpop.f32.mrf.mxu0
        %230 = vdwg.mxu0
        %v231 = vpack.c.bf16 %v228, %v228
        %vm232 = vcmask 60416
        %233 = vst.msk [vmem:[%s183] sm:$0xf] %vm232, %v231
        %s234 = scalar_lea.vmem %s1, 16
        %v235 = vld [vmem:[%s234] sm:$0xf]
        %v236 = vld [vmem:[%s234 + $0x4] sm:$0xf]
        %v237 = vld [vmem:[%s234 + $0x8] sm:$0xf]
        %v238 = vld [vmem:[%s234 + $0xc] sm:$0xf]
        %s239 = scalar_lea.vmem %s2, 1
        %v240 = vld [vmem:[%s239] sm:$0x1]
        %v242 = vperm.slane %v240, 0
        %v248 = vunpack.c.l.b16 %v235
        %v249 = vunpack.c.l.b16 %v236
        %v250 = vunpack.c.l.b16 %v237
        %v251 = vunpack.c.l.b16 %v238
        %v252 = vpack.c.b16 %v249, %v248
        %v253 = vpack.c.b16 %v251, %v250
        %256 = vmatpush.bf16.msra.mxu0 0
        %257 = vmatpush.bf16.msra.mxu0 0
        %258 = vmatpush.bf16.msra.mxu0 0
        %259 = vmatpush.bf16.msra.mxu0 0
        %260 = vmatpush.bf16.msra.mxu0 0
        %261 = vmatpush.bf16.msra.mxu0 0
        %262 = vmatpush.bf16.msra.mxu0 %v253
        %263 = vmatpush.bf16.msra.mxu0 %v252
        %264 = vmatmul.bf16.gmra.mxu0 %v216
        %v265 = vpop.f32.mrf.mxu0
        %v266 = vadd.f32 %v242, %v265
        %v267 = vpop.f32.mrf.mxu0
        %268 = vdwg.mxu0
        %v269 = vpack.c.bf16 %v266, %v266
        %s270 = scalar_lea.vmem %s183, 4 [#allocation2]
        %271 = vst.msk [vmem:[%s270] sm:$0xf] %vm232, %v269
        %s272 = scalar_lea.vmem %s1, 32
        %v273 = vld [vmem:[%s272] sm:$0xf]
        %v274 = vld [vmem:[%s272 + $0x4] sm:$0xf]
        %v275 = vld [vmem:[%s272 + $0x8] sm:$0xf]
        %v276 = vld [vmem:[%s272 + $0xc] sm:$0xf]
        %s277 = scalar_lea.vmem %s2, 2
        %v278 = vld [vmem:[%s277] sm:$0x1]
        %v280 = vperm.slane %v278, 0
        %v286 = vunpack.c.l.b16 %v273
        %v287 = vunpack.c.l.b16 %v274
        %v288 = vunpack.c.l.b16 %v275
        %v289 = vunpack.c.l.b16 %v276
        %v290 = vpack.c.b16 %v287, %v286
        %v291 = vpack.c.b16 %v289, %v288
        %294 = vmatpush.bf16.msra.mxu0 0
        %295 = vmatpush.bf16.msra.mxu0 0
        %296 = vmatpush.bf16.msra.mxu0 0
        %297 = vmatpush.bf16.msra.mxu0 0
        %298 = vmatpush.bf16.msra.mxu0 0
        %299 = vmatpush.bf16.msra.mxu0 0
        %300 = vmatpush.bf16.msra.mxu0 %v291
        %301 = vmatpush.bf16.msra.mxu0 %v290
        %302 = vmatmul.bf16.gmra.mxu0 %v216
        %v303 = vpop.f32.mrf.mxu0
        %v304 = vadd.f32 %v280, %v303
        %v305 = vpop.f32.mrf.mxu0
        %306 = vdwg.mxu0
        %v307 = vpack.c.bf16 %v304, %v304
        %s308 = scalar_lea.vmem %s183, 8 [#allocation2]
        %309 = vst.msk [vmem:[%s308] sm:$0xf] %vm232, %v307
        %s310 = scalar_lea.vmem %s1, 48
        %v311 = vld [vmem:[%s310] sm:$0xf]
        %v312 = vld [vmem:[%s310 + $0x4] sm:$0xf]
        %v313 = vld [vmem:[%s310 + $0x8] sm:$0xf]
        %v314 = vld [vmem:[%s310 + $0xc] sm:$0xf]
        %s315 = scalar_lea.vmem %s2, 3
        %v316 = vld [vmem:[%s315] sm:$0x1]
        %v318 = vperm.slane %v316, 0
        %v324 = vunpack.c.l.b16 %v311
        %v325 = vunpack.c.l.b16 %v312
        %v326 = vunpack.c.l.b16 %v313
        %v327 = vunpack.c.l.b16 %v314
        %v328 = vpack.c.b16 %v325, %v324
        %v329 = vpack.c.b16 %v327, %v326
        %332 = vmatpush.bf16.msra.mxu0 0
        %333 = vmatpush.bf16.msra.mxu0 0
        %334 = vmatpush.bf16.msra.mxu0 0
        %335 = vmatpush.bf16.msra.mxu0 0
        %336 = vmatpush.bf16.msra.mxu0 0
        %337 = vmatpush.bf16.msra.mxu0 0
        %338 = vmatpush.bf16.msra.mxu0 %v329
        %339 = vmatpush.bf16.msra.mxu0 %v328
        %340 = vmatmul.bf16.gmra.mxu0 %v216
        %v341 = vpop.f32.mrf.mxu0
        %v342 = vadd.f32 %v318, %v341
        %v343 = vpop.f32.mrf.mxu0
        %344 = vdwg.mxu0
        %v345 = vpack.c.bf16 %v342, %v342
        %s346 = scalar_lea.vmem %s183, 12 [#allocation2]
        %347 = vst.msk [vmem:[%s346] sm:$0xf] %vm232, %v345
        %s348 = sand.u32 %s109, 1
        %s349 = scalar_lea.sflag [#allocation3], %s348
        %s350 = sand.u32 %s109, 1
        %s351 = smul.addr %s350, 16
        %s352 = scalar_lea.vmem [#allocation2], %s351
        // Predicated region
        $region33: #{tpu_custom_call.1} parent=31 // pred_check
          %p353 = pneg %p119
        $region34: #{tpu_custom_call.1} parent=31 // pred_check_branch
          %355 = sbr.rel (%p353) target = $region36
        $region35: #{tpu_custom_call.1} parent=31 // pred_region
          %357 = vsyncadd %s349, 0
          %s358 = smul.addr %s21, 4
          %s359 = sadd.s32 %s22, %s358
          %s360 = smul.addr %s359, 4
          %s361 = scalar_lea.hbm %s3, %s360
          %s362 = sshll.u32 %s352, 4
          %s363 = int_to_ptr.vmem [resolvable:$true] %s362
          %s364 = sshll.u32 %s361, 4
          %s365 = int_to_ptr.hbm [resolvable:$true] %s364
          %370 = dma.vmem_to_hbm [thread:$0]  %s363, 256, %s365, %s349, 64, 64, 4
        $region36: #{tpu_custom_call.1} parent=31 // pred_fallthru
          _
      $region32: #{tpu_custom_call.1} parent=5 // pred_fallthru
        _
      %p371 = scmp.le.s32.totalorder 2, %s12
      // Predicated region
      $region37: #{tpu_custom_call.1} parent=5 // pred_check
        %p372 = pneg %p371
      $region38: #{tpu_custom_call.1} parent=5 // pred_check_branch
        %374 = sbr.rel (%p372) target = $region40
      $region39: #{tpu_custom_call.1} parent=5 // pred_region
        %s375 = ssub.s32 %s12, 2
        // Predicated region
        $region41: #{tpu_custom_call.1} parent=39 // pred_check
          %p376 = pneg %p125
        $region42: #{tpu_custom_call.1} parent=39 // pred_check_branch
          %378 = sbr.rel (%p376) target = $region44
        $region43: #{tpu_custom_call.1} parent=39 // pred_region
          %s379 = sand.u32 %s110, 1
          %s380 = scalar_lea.sflag [#allocation3], %s379
          %s381 = sand.u32 %s110, 1
          %s382 = smul.addr %s381, 16
          %s383 = scalar_lea.vmem [#allocation2], %s382
          %385 = dma.done %s380, 256
        $region44: #{tpu_custom_call.1} parent=39 // pred_fallthru
          _
      $region40: #{tpu_custom_call.1} parent=5 // pred_fallthru
        _
    $region6: #{tpu_custom_call.1} parent=1 // loop_footer
      %s16 = sadd.s32 1, %s12
    $region7: #{tpu_custom_call.1} parent=1 // loop_footer_branch
      %11 = sbr.rel target = $region3
    $region8: #{tpu_custom_call.1} parent=1 // loop_exit
      _
    %386 = vsyncpa [#allocation3], 1
    %s387 = scalar_lea.sflag [#allocation3], 1
    %388 = vsyncpa %s387, 1

</llo_original>
